<compile_context>
chip_gen: v7x
topology: tpu7x:2x2x1
jax: 0.10.0
libtpu: 0.0.40
codegen_flags: <defaults>
</compile_context>

<pallas_src>
import jax
import jax.numpy as jnp
from jax import lax
from jax.experimental import pallas as pl
from jax.experimental.pallas import tpu as pltpu


def gate_kernel(x_ref, w_ref, b_ref, o_ref):
    # x_ref: (tm, D)   input rows
    # w_ref: (tn, D)   rows of the PyTorch-layout (out, in) weight
    # b_ref: (1, tn)   bias slice
    # o_ref: (tm, tn)  output tile
    acc = lax.dot_general(
        x_ref[...],
        w_ref[...],
        dimension_numbers=(((1,), (1,)), ((), ())),   # x @ W.T on the MXU
        preferred_element_type=jnp.float32,
    )
    o_ref[...] = (acc + b_ref[...]).astype(o_ref.dtype)


def _choose_tiles(M, D, itemsize, budget_bytes):
    """Pick (tm, tn, vmem_needed). Prefer keeping all of W resident (tn == D)."""

    def vmem_cost(tm, tn):
        weight = 2 * tn * D * itemsize        # double-buffered weight tile
        bias = 2 * tn * itemsize
        x_io = 2 * tm * D * itemsize          # double-buffered input tile
        o_io = 2 * tm * tn * itemsize         # double-buffered output tile
        return weight + bias + x_io + o_io

    # Preferred: full weight resident along its out-dim (grid-invariant along
    # the row axis -> never re-fetched). tm is the biggest 128-multiple that
    # fits the budget, or all of M when M is smaller than one tile.
    for tm in (1024, 512, 256, 128):
        tm_eff = min(tm, M)
        cost = vmem_cost(tm_eff, D)
        if cost <= budget_bytes:
            return tm_eff, D, cost

    # Large D: also tile W's output-feature dim.
    for tn in (512, 256, 128):
        for tm in (512, 256, 128):
            tm_eff = min(tm, M)
            cost = vmem_cost(tm_eff, tn)
            if cost <= budget_bytes:
                return tm_eff, tn, cost

    # TODO(synk): K-tiled accumulator path for feature dims whose full K axis
    # does not fit VMEM even with 128-wide N tiles.
    raise NotImplementedError("dim too large for the K-resident GATE kernel")


def gate_forward(x, weight, bias):
    """y = x @ weight.T + bias   (torch.nn.Linear forward, f32 path)."""
    orig_shape = x.shape
    D = orig_shape[-1]
    x2 = x.reshape(-1, D)
    M = x2.shape[0]
    assert weight.shape == (D, D), weight.shape
    assert bias.shape == (D,), bias.shape

    itemsize = x2.dtype.itemsize
    # Conservative tile budget: comfortably inside v7x's 64 MiB physical VMEM.
    budget = 36 << 20
    tm, tn, needed = _choose_tiles(M, D, itemsize, budget)
    vmem_limit = int(min(max(2 * needed, 32 << 20), 48 << 20))

    b_row = bias.reshape(1, D)   # bias as a (1, D) lane-major row (tiny)

    grid = (pl.cdiv(M, tm), pl.cdiv(D, tn))

    call = pl.pallas_call(
        gate_kernel,
        out_shape=jax.ShapeDtypeStruct((M, D), x2.dtype),
        grid_spec=pltpu.PrefetchScalarGridSpec(
            num_scalar_prefetch=0,
            grid=grid,
            in_specs=[
                pl.BlockSpec((tm, D), lambda i, j: (i, 0)),    # x rows
                pl.BlockSpec((tn, D), lambda i, j: (j, 0)),    # W rows (out,in)
                pl.BlockSpec((1, tn), lambda i, j: (0, j)),    # bias slice
            ],
            out_specs=pl.BlockSpec((tm, tn), lambda i, j: (i, j)),
        ),
        compiler_params=pltpu.CompilerParams(
            dimension_semantics=("parallel", "parallel"),
            vmem_limit_bytes=vmem_limit,
        ),
    )
    y = call(x2, weight, b_row)
    return y.reshape(orig_shape)


if __name__ == "__main__":
    key = jax.random.PRNGKey(0)
    kx, kw, kb = jax.random.split(key, 3)

    M, D = 16, 32   # small batch of node features through GATE(dim=32)
    x = jax.random.normal(kx, (M, D), dtype=jnp.float32)

    # Deterministic Linear(dim, dim) params, PyTorch-style U(-1/sqrt(D), 1/sqrt(D)).
    bound = 1.0 / jnp.sqrt(jnp.float32(D))
    weight = jax.random.uniform(kw, (D, D), minval=-bound, maxval=bound,
                                dtype=jnp.float32)
    bias = jax.random.uniform(kb, (D,), minval=-bound, maxval=bound,
                              dtype=jnp.float32)

    y = gate_forward(x, weight, bias)
    jax.block_until_ready(y)

    # Reference check against plain JAX (same semantics as torch Linear).
    y_ref = x @ weight.T + bias
    assert y.shape == y_ref.shape
    assert jnp.allclose(y, y_ref, atol=1e-5, rtol=1e-5), "mismatch vs reference"

    print("KERNEL_OK")
</pallas_src>

<mosaic_0001>
module attributes {stable_mosaic.version = 11 : i64} {
  func.func @gate_kernel(%arg0: i32, %arg1: i32, %arg2: memref<16x32xf32, #tpu.memory_space<vmem>>, %arg3: memref<32x32xf32, #tpu.memory_space<vmem>>, %arg4: memref<1x32xf32, #tpu.memory_space<vmem>>, %arg5: memref<16x32xf32, #tpu.memory_space<vmem>>) attributes {dimension_semantics = [#tpu.dimension_semantics<parallel>, #tpu.dimension_semantics<parallel>], iteration_bounds = array<i64: 1, 1>, scalar_prefetch = 0 : i64, scratch_operands = 0 : i64, tpu.core_type = #tpu.core_type<tc>, window_params = [{transform_indices = @transform_0, window_bounds = array<i64: 16, 32>}, {transform_indices = @transform_1, window_bounds = array<i64: 32, 32>}, {transform_indices = @transform_2, window_bounds = array<i64: 1, 32>}, {transform_indices = @transform_3, window_bounds = array<i64: 16, 32>}]} {
    %c0 = arith.constant 0 : index
    %c0_0 = arith.constant 0 : index
    %0 = vector.load %arg2[%c0, %c0_0] : memref<16x32xf32, #tpu.memory_space<vmem>>, vector<16x32xf32>
    %c0_1 = arith.constant 0 : index
    %c0_2 = arith.constant 0 : index
    %1 = vector.load %arg3[%c0_1, %c0_2] : memref<32x32xf32, #tpu.memory_space<vmem>>, vector<32x32xf32>
    %cst = arith.constant dense<0.000000e+00> : vector<16x32xf32>
    %2 = tpu.matmul %0, %1, %cst {dimension_numbers = #tpu.dot_dimension_numbers<[1], [1], [0], [0], [0, 0, 1, 0], [], []>} : vector<16x32xf32>, vector<32x32xf32>, vector<16x32xf32> -> vector<16x32xf32>
    %c0_3 = arith.constant 0 : index
    %c0_4 = arith.constant 0 : index
    %3 = vector.load %arg4[%c0_3, %c0_4] : memref<1x32xf32, #tpu.memory_space<vmem>>, vector<1x32xf32>
    %4 = vector.broadcast %3 : vector<1x32xf32> to vector<16x32xf32>
    %5 = arith.addf %2, %4 : vector<16x32xf32>
    %c0_5 = arith.constant 0 : index
    %c0_6 = arith.constant 0 : index
    %6 = vector.load %arg5[%c0_5, %c0_6] : memref<16x32xf32, #tpu.memory_space<vmem>>, vector<16x32xf32>
    tpu.vector_store %arg5[%c0_5, %c0_6], %5 {strides = array<i32>} : memref<16x32xf32, #tpu.memory_space<vmem>>, vector<16x32xf32>,
    return
  }
  func.func @transform_0(%arg0: i32, %arg1: i32) -> (i32, i32) {
    %c0_i32 = arith.constant 0 : i32
    %c0_i32_0 = arith.constant 0 : i32
    return %arg0, %c0_i32 : i32, i32
  }
  func.func @transform_1(%arg0: i32, %arg1: i32) -> (i32, i32) {
    %c0_i32 = arith.constant 0 : i32
    %c0_i32_0 = arith.constant 0 : i32
    return %arg1, %c0_i32 : i32, i32
  }
  func.func @transform_2(%arg0: i32, %arg1: i32) -> (i32, i32) {
    %c0_i32 = arith.constant 0 : i32
    %c0_i32_0 = arith.constant 0 : i32
    return %c0_i32, %arg1 : i32, i32
  }
  func.func @transform_3(%arg0: i32, %arg1: i32) -> (i32, i32) {
    %c0_i32 = arith.constant 0 : i32
    return %arg0, %arg1 : i32, i32
  }
}

</mosaic_0001>

<llo_original>
// kernel: tpu_custom_call.1
$region0: #{tpu_custom_call.1}
  #allocation0 [shape = 'u32[]', space=smem, size = 0x4, offset = 0x4, fixed_abs, tag = 'smem constant byte address 0x4 - core index']
  #allocation1 [shape = 'u32[144,128]{1,0:T(1,128)}', space=vmem, size = 0x12000, scoped, tag = 'internal scratch']
  %s0 = inlined_call_operand.hbm [shape: f32[16,32], index: 0, kind: input, shape index: {}]
  %s1 = inlined_call_operand.hbm [shape: f32[32,32], index: 1, kind: input, shape index: {}]
  %s2 = inlined_call_operand.vmem [shape: f32[1,32], index: 2, kind: input, shape index: {}]
  %s3 = inlined_call_operand.hbm [shape: f32[16,32], index: 3, kind: output, shape index: {}]
  %s4 = sld [smem:[#allocation0]]
  $region30: #{tpu_custom_call.1} parent=0
    _
  %s6 = ssub.s32 1, %s4
  %s7 = scalar_select 0, %s6, %s4
  $region1: #{tpu_custom_call.1} parent=0
    #allocation2 [shape = 'u8[8192]{0}', space=vmem, size = 0x2000, scoped, tag = 'input window, operand 0, single buffered']
    #allocation3 [shape = 's32[1]{0}', space=sflag, size = 0x4, scoped, tag = 'scoped memory for tpu_custom_call.1']
    #allocation4 [shape = 's32[1]{0}', space=sflag, size = 0x4, scoped, tag = 'scoped memory for tpu_custom_call.1']
    #allocation5 [shape = 'u8[16384]{0}', space=vmem, size = 0x4000, scoped, tag = 'input window, operand 1, single buffered']
    #allocation6 [shape = 's32[1]{0}', space=sflag, size = 0x4, scoped, tag = 'scoped memory for tpu_custom_call.1']
    #allocation7 [shape = 'u8[8192]{0}', space=vmem, size = 0x2000, scoped, tag = 'output window, operand 0, single buffered']
    %8 = vsyncpa [#allocation3], 0
    %9 = vsyncpa [#allocation6], 0
    %10 = vsyncpa [#allocation4], 0
    // Predicated region
    $region2: #{tpu_custom_call.1} parent=1 // pred_check
      _
    $region3: #{tpu_custom_call.1} parent=1 // pred_check_branch
      %12 = sbr.rel (0) target = $region5
    $region4: #{tpu_custom_call.1} parent=1 // pred_region
      %s14 = ssub.s32 256, 256
      %15 = vsyncadd [#allocation3], %s14
      %s16 = sshll.u32 [#allocation2], 4
      %s17 = int_to_ptr.vmem [resolvable:$true] %s16
      %22 = dma.hbm_to_vmem [thread:$0]  %s0, 256, %s17, [#allocation3], 128, 128, 8
    $region5: #{tpu_custom_call.1} parent=1 // pred_fallthru
      _
    // Predicated region
    $region6: #{tpu_custom_call.1} parent=1 // pred_check
      _
    $region7: #{tpu_custom_call.1} parent=1 // pred_check_branch
      %24 = sbr.rel (0) target = $region9
    $region8: #{tpu_custom_call.1} parent=1 // pred_region
      %s26 = ssub.s32 512, 512
      %27 = vsyncadd [#allocation6], %s26
      %s28 = sshll.u32 [#allocation5], 4
      %s29 = int_to_ptr.vmem [resolvable:$true] %s28
      %34 = dma.hbm_to_vmem [thread:$0]  %s1, 512, %s29, [#allocation6], 128, 128, 8
    $region9: #{tpu_custom_call.1} parent=1 // pred_fallthru
      _
    // Predicated region
    $region10: #{tpu_custom_call.1} parent=1 // pred_check
      _
    $region11: #{tpu_custom_call.1} parent=1 // pred_check_branch
      %36 = sbr.rel (0) target = $region13
    $region12: #{tpu_custom_call.1} parent=1 // pred_region
      _
    $region13: #{tpu_custom_call.1} parent=1 // pred_fallthru
      _
    // Predicated region
    $region14: #{tpu_custom_call.1} parent=1 // pred_check
      _
    $region15: #{tpu_custom_call.1} parent=1 // pred_check_branch
      %38 = sbr.rel (0) target = $region17
    $region16: #{tpu_custom_call.1} parent=1 // pred_region
      %39 = dma.done [#allocation3], 256
    $region17: #{tpu_custom_call.1} parent=1 // pred_fallthru
      _
    // Predicated region
    $region18: #{tpu_custom_call.1} parent=1 // pred_check
      _
    $region19: #{tpu_custom_call.1} parent=1 // pred_check_branch
      %41 = sbr.rel (0) target = $region21
    $region20: #{tpu_custom_call.1} parent=1 // pred_region
      %42 = dma.done [#allocation6], 512
    $region21: #{tpu_custom_call.1} parent=1 // pred_fallthru
      _
    %v43 = vld [vmem:[#allocation2] sm:$0xff]
    %v44 = vld [vmem:[#allocation2 + $0x8] sm:$0xff]
    %v45 = vld [vmem:[#allocation5] sm:$0xff]
    %v46 = vld [vmem:[#allocation5 + $0x8] sm:$0xff]
    %v47 = vld [vmem:[#allocation5 + $0x10] sm:$0xff]
    %v48 = vld [vmem:[#allocation5 + $0x18] sm:$0xff]
    %v49 = vld [vmem:[%s2] sm:$0x1]
    %v51 = vlaneseq
    %v52 = vshrl.u32 %v51, 7
    %v53 = vsub.s32 0, %v52
    %v54 = vrot.slane %v49, %v53
    %vm56 = vcmask 261120
    %v58 = vsel %vm56, %v43, 0
    %v61 = vsel %vm56, %v44, 0
    %v64 = vsel %vm56, %v45, 0
    %v67 = vsel %vm56, %v46, 0
    %v70 = vsel %vm56, %v47, 0
    %v73 = vsel %vm56, %v48, 0
    %75 = vmatprep.subr.mxu0 0.0
    %76 = vmatpush1.xpose.msra.mxu0 %v64
    %77 = vmatprep.subr.mxu0 0.0
    %78 = vmatpush1.xpose.msra.mxu0 %v67
    %79 = vmatprep.subr.mxu0 0.0
    %80 = vmatpush1.xpose.msra.mxu0 %v70
    %81 = vmatprep.subr.mxu0 0.0
    %82 = vmatpush1.xpose.msra.mxu0 %v73
    %83 = vmatprep.subr.mxu0 0.0
    %84 = vmatpush1.xpose.msra.mxu0 0.0
    %85 = vmatprep.subr.mxu0 0.0
    %86 = vmatpush1.xpose.msra.mxu0 0.0
    %87 = vmatprep.subr.mxu0 0.0
    %88 = vmatpush1.xpose.msra.mxu0 0.0
    %89 = vmatprep.subr.mxu0 0.0
    %90 = vmatpush1.xpose.msra.mxu0 0.0
    %91 = vmatprep.subr.mxu0 0.0
    %92 = vmatpush1.xpose.msra.mxu0 0.0
    %93 = vmatprep.subr.mxu0 0.0
    %94 = vmatpush1.xpose.msra.mxu0 0.0
    %95 = vmatprep.subr.mxu0 0.0
    %96 = vmatpush1.xpose.msra.mxu0 0.0
    %97 = vmatprep.subr.mxu0 0.0
    %98 = vmatpush1.xpose.msra.mxu0 0.0
    %99 = vmatprep.subr.mxu0 0.0
    %100 = vmatpush1.xpose.msra.mxu0 0.0
    %101 = vmatprep.subr.mxu0 0.0
    %102 = vmatpush1.xpose.msra.mxu0 0.0
    %103 = vmatprep.subr.mxu0 0.0
    %104 = vmatpush1.xpose.msra.mxu0 0.0
    %105 = vmatprep.subr.mxu0 0.0
    %106 = vmatpush1.xpose.msra.mxu0 0.0
    %107 = vmatprep.subr.mxu0 0.0
    %108 = vmatpush1.xpose.msra.mxu0 0.0
    %109 = vmatprep.subr.mxu0 0.0
    %110 = vmatpush1.xpose.msra.mxu0 0.0
    %111 = vmatprep.subr.mxu0 0.0
    %112 = vmatpush1.xpose.msra.mxu0 0.0
    %113 = vmatprep.subr.mxu0 0.0
    %114 = vmatpush1.xpose.msra.mxu0 0.0
    %115 = vmatprep.subr.mxu0 0.0
    %116 = vmatpush1.xpose.msra.mxu0 0.0
    %117 = vmatprep.subr.mxu0 0.0
    %118 = vmatpush1.xpose.msra.mxu0 0.0
    %119 = vmatprep.subr.mxu0 0.0
    %120 = vmatpush1.xpose.msra.mxu0 0.0
    %121 = vmatprep.subr.mxu0 0.0
    %122 = vmatpush1.xpose.msra.mxu0 0.0
    %123 = vmatprep.subr.mxu0 0.0
    %124 = vmatpush1.xpose.msra.mxu0 0.0
    %125 = vmatprep.subr.mxu0 0.0
    %126 = vmatpush1.xpose.msra.mxu0 0.0
    %127 = vmatprep.subr.mxu0 0.0
    %128 = vmatpush1.xpose.msra.mxu0 0.0
    %129 = vmatprep.subr.mxu0 0.0
    %130 = vmatpush1.xpose.msra.mxu0 0.0
    %131 = vmatprep.subr.mxu0 0.0
    %132 = vmatpush1.xpose.msra.mxu0 0.0
    %133 = vmatprep.subr.mxu0 0.0
    %134 = vmatpush1.xpose.msra.mxu0 0.0
    %135 = vmatprep.subr.mxu0 0.0
    %136 = vmatpush1.xpose.msra.mxu0 0.0
    %137 = vmatprep.subr.mxu0 0.0
    %138 = vmatpush1.xpose.msra.mxu0 0.0
    %139 = vmatprep.mubr.f32.mxu0 0.0
    %140 = vmatmul.mubr.f32.gmra.mrb[0].mxu0 %v58
    %v141 = vpop.f32.mrb[0].mxu0
    %v142 = vadd.f32 %v54, %v141
    %v143 = vpop.f32.mrb[0].mxu0
    %144 = vmatprep.mubr.f32.mxu0 0.0
    %145 = vmatmul.mubr.f32.gmra.mrb[0].mxu0 %v61
    %v146 = vpop.f32.mrb[0].mxu0
    %v147 = vadd.f32 %v54, %v146
    %v148 = vpop.f32.mrb[0].mxu0
    %149 = vdwg.mxu0
    %150 = vst.msk [vmem:[#allocation7] sm:$0xff] %vm56, %v142
    %151 = vst.msk [vmem:[#allocation7 + $0x8] sm:$0xff] %vm56, %v147
    // Predicated region
    $region22: #{tpu_custom_call.1} parent=1 // pred_check
      _
    $region23: #{tpu_custom_call.1} parent=1 // pred_check_branch
      %153 = sbr.rel (0) target = $region25
    $region24: #{tpu_custom_call.1} parent=1 // pred_region
      %s155 = ssub.s32 256, 256
      %156 = vsyncadd [#allocation4], %s155
      %s157 = sshll.u32 [#allocation7], 4
      %s158 = int_to_ptr.vmem [resolvable:$true] %s157
      %163 = dma.vmem_to_hbm [thread:$0]  %s158, 256, %s3, [#allocation4], 128, 128, 8
    $region25: #{tpu_custom_call.1} parent=1 // pred_fallthru
      _
    // Predicated region
    $region26: #{tpu_custom_call.1} parent=1 // pred_check
      _
    $region27: #{tpu_custom_call.1} parent=1 // pred_check_branch
      %165 = sbr.rel (0) target = $region29
    $region28: #{tpu_custom_call.1} parent=1 // pred_region
      %166 = dma.done [#allocation4], 256
    $region29: #{tpu_custom_call.1} parent=1 // pred_fallthru
      _
    %167 = vsyncpa [#allocation3], 1
    %168 = vsyncpa [#allocation6], 1
    %169 = vsyncpa [#allocation4], 1

</llo_original>
